<compile_context>
chip_gen: v6e
topology: v6e:2x2x1
jax: 0.10.0
libtpu: 0.0.40
codegen_flags: <defaults>
</compile_context>

<pallas_src>
import jax
import jax.numpy as jnp
from jax.experimental import pallas as pl
from jax.experimental.pallas import tpu as pltpu


def _round_up(x: int, m: int) -> int:
    return ((x + m - 1) // m) * m


def age_mlp_kernel(xt_ref, w1t_ref, b1t_ref, w2t_ref, b2t_ref, ot_ref):
    # xt_ref : (1, TB)  -- age scalars, batch on the lane axis
    # w1t_ref: (D, 1)   -- Linear(1, D) weight, transposed
    # b1t_ref: (D, 1)
    # w2t_ref: (D, D)   -- Linear(D, D) weight, transposed (out_f, in_f)
    # b2t_ref: (D, 1)
    # ot_ref : (D, TB)  -- output^T
    x = xt_ref[...]  # (1, TB) f32

    # Layer 1: Linear(1, D) + ReLU as a VPU broadcast multiply (outer product).
    # (D, 1) * (1, TB) -> (D, TB); no MXU round-trip for a K=1 matmul.
    h = jnp.maximum(w1t_ref[...] * x + b1t_ref[...], 0.0)

    # Layer 2: Linear(D, D) + ReLU on the MXU, lane-dense N = TB.
    o = jnp.dot(w2t_ref[...], h, preferred_element_type=jnp.float32) + b2t_ref[...]
    ot_ref[...] = jnp.maximum(o, 0.0).astype(ot_ref.dtype)


def age_embed_mlp(age_scalar, w1, b1, w2, b2, *, tb=512):
    """age_scalar: (B, 1) float32 -> (B, D) float32.

    Weights are stored as (in_features, out_features) (i.e. PyTorch W.T):
      w1: (1, D), b1: (1, D) or (D,), w2: (D, D), b2: (1, D) or (D,)
    """
    B = age_scalar.shape[0]
    D = w1.shape[1]

    # Batch tile: multiple of 128 lanes; shrink for small B, pad B up to it.
    tb = min(tb, _round_up(max(B, 1), 128))
    Bp = _round_up(B, tb)

    # Transposed, batch-padded layout (layout plumbing done in the wrapper).
    xt = jnp.zeros((1, Bp), jnp.float32).at[:, :B].set(
        age_scalar.reshape(1, B).astype(jnp.float32)
    )
    w1t = w1.reshape(D, 1).astype(jnp.float32)   # (D, 1)
    b1t = b1.reshape(D, 1).astype(jnp.float32)   # (D, 1)
    w2t = w2.T.astype(jnp.float32)               # (D, D) = (out_f, in_f)
    b2t = b2.reshape(D, 1).astype(jnp.float32)   # (D, 1)

    out_t = pl.pallas_call(
        age_mlp_kernel,
        out_shape=jax.ShapeDtypeStruct((D, Bp), jnp.float32),
        grid=(Bp // tb,),
        in_specs=[
            pl.BlockSpec((1, tb), lambda i: (0, i)),   # x^T: tiled over batch
            pl.BlockSpec((D, 1), lambda i: (0, 0)),    # w1^T: VMEM-resident
            pl.BlockSpec((D, 1), lambda i: (0, 0)),    # b1^T
            pl.BlockSpec((D, D), lambda i: (0, 0)),    # w2^T
            pl.BlockSpec((D, 1), lambda i: (0, 0)),    # b2^T
        ],
        out_specs=pl.BlockSpec((D, tb), lambda i: (0, i)),
        compiler_params=pltpu.CompilerParams(
            dimension_semantics=("parallel",),          # megacore-shard batch tiles
            vmem_limit_bytes=32 * 1024 * 1024,          # safe on v5e/v6e/v7x
        ),
    )(xt, w1t, b1t, w2t, b2t)

    # Back to PyTorch layout (B, D), dropping batch padding.
    return out_t[:, :B].T


def init_params(key, age_embed_dim=16):
    """Deterministic init mimicking nn.Linear defaults (uniform(-1/sqrt(fan_in), +))."""
    k1, k2, k3, k4 = jax.random.split(key, 4)
    D = age_embed_dim
    bound1 = 1.0 / jnp.sqrt(1.0)        # fan_in = 1
    bound2 = 1.0 / jnp.sqrt(float(D))   # fan_in = D
    # Stored as (in, out) == W.T relative to PyTorch's (out, in)
    w1 = jax.random.uniform(k1, (1, D), jnp.float32, -bound1, bound1)
    b1 = jax.random.uniform(k2, (1, D), jnp.float32, -bound1, bound1)
    w2 = jax.random.uniform(k3, (D, D), jnp.float32, -bound2, bound2)
    b2 = jax.random.uniform(k4, (1, D), jnp.float32, -bound2, bound2)
    return w1, b1, w2, b2


def reference(age_scalar, w1, b1, w2, b2):
    h = jnp.maximum(age_scalar @ w1 + b1, 0.0)
    return jnp.maximum(h @ w2 + b2, 0.0)


if __name__ == "__main__":
    key = jax.random.PRNGKey(0)
    kparams, kx = jax.random.split(key)

    B, D = 8, 16
    w1, b1, w2, b2 = init_params(kparams, age_embed_dim=D)
    # scalar age in [0, 1], shape (B, 1)
    age = jax.random.uniform(kx, (B, 1), jnp.float32, 0.0, 1.0)

    out = age_embed_mlp(age, w1, b1, w2, b2)
    out = jax.block_until_ready(out)

    ref = reference(age, w1, b1, w2, b2)
    assert out.shape == (B, D), out.shape
    assert jnp.allclose(out, ref, atol=1e-5, rtol=1e-5), "mismatch vs reference"

    print("KERNEL_OK")
</pallas_src>

<mosaic_0001>
module attributes {stable_mosaic.version = 11 : i64} {
  func.func @age_mlp_kernel(%arg0: i32, %arg1: memref<1x128xf32, #tpu.memory_space<vmem>>, %arg2: memref<16x1xf32, #tpu.memory_space<vmem>>, %arg3: memref<16x1xf32, #tpu.memory_space<vmem>>, %arg4: memref<16x16xf32, #tpu.memory_space<vmem>>, %arg5: memref<16x1xf32, #tpu.memory_space<vmem>>, %arg6: memref<16x128xf32, #tpu.memory_space<vmem>>) attributes {dimension_semantics = [#tpu.dimension_semantics<parallel>], iteration_bounds = array<i64: 1>, scalar_prefetch = 0 : i64, scratch_operands = 0 : i64, tpu.core_type = #tpu.core_type<tc>, window_params = [{transform_indices = @transform_0, window_bounds = array<i64: 1, 128>}, {pipeline_mode = #tpu.pipeline_mode<synchronous>, transform_indices = @transform_1, window_bounds = array<i64: 16, 1>}, {pipeline_mode = #tpu.pipeline_mode<synchronous>, transform_indices = @transform_2, window_bounds = array<i64: 16, 1>}, {pipeline_mode = #tpu.pipeline_mode<synchronous>, transform_indices = @transform_3, window_bounds = array<i64: 16, 16>}, {pipeline_mode = #tpu.pipeline_mode<synchronous>, transform_indices = @transform_4, window_bounds = array<i64: 16, 1>}, {transform_indices = @transform_5, window_bounds = array<i64: 16, 128>}]} {
    %c0 = arith.constant 0 : index
    %c0_0 = arith.constant 0 : index
    %0 = vector.load %arg1[%c0, %c0_0] : memref<1x128xf32, #tpu.memory_space<vmem>>, vector<1x128xf32>
    %c0_1 = arith.constant 0 : index
    %c0_2 = arith.constant 0 : index
    %1 = vector.load %arg2[%c0_1, %c0_2] : memref<16x1xf32, #tpu.memory_space<vmem>>, vector<16x1xf32>
    %2 = vector.broadcast %1 : vector<16x1xf32> to vector<16x128xf32>
    %3 = vector.broadcast %0 : vector<1x128xf32> to vector<16x128xf32>
    %4 = arith.mulf %2, %3 : vector<16x128xf32>
    %c0_3 = arith.constant 0 : index
    %c0_4 = arith.constant 0 : index
    %5 = vector.load %arg3[%c0_3, %c0_4] : memref<16x1xf32, #tpu.memory_space<vmem>>, vector<16x1xf32>
    %6 = vector.broadcast %5 : vector<16x1xf32> to vector<16x128xf32>
    %7 = arith.addf %4, %6 : vector<16x128xf32>
    %cst = arith.constant 0.000000e+00 : f32
    %8 = vector.broadcast %cst : f32 to vector<16x128xf32>
    %9 = arith.maximumf %7, %8 : vector<16x128xf32>
    %c0_5 = arith.constant 0 : index
    %c0_6 = arith.constant 0 : index
    %10 = vector.load %arg4[%c0_5, %c0_6] : memref<16x16xf32, #tpu.memory_space<vmem>>, vector<16x16xf32>
    %cst_7 = arith.constant dense<0.000000e+00> : vector<16x128xf32>
    %11 = tpu.matmul %10, %9, %cst_7 {dimension_numbers = #tpu.dot_dimension_numbers<[1], [0], [0], [1], [0, 0, 1, 1], [], []>} : vector<16x16xf32>, vector<16x128xf32>, vector<16x128xf32> -> vector<16x128xf32>
    %c0_8 = arith.constant 0 : index
    %c0_9 = arith.constant 0 : index
    %12 = vector.load %arg5[%c0_8, %c0_9] : memref<16x1xf32, #tpu.memory_space<vmem>>, vector<16x1xf32>
    %13 = vector.broadcast %12 : vector<16x1xf32> to vector<16x128xf32>
    %14 = arith.addf %11, %13 : vector<16x128xf32>
    %cst_10 = arith.constant 0.000000e+00 : f32
    %15 = vector.broadcast %cst_10 : f32 to vector<16x128xf32>
    %16 = arith.maximumf %14, %15 : vector<16x128xf32>
    %c0_11 = arith.constant 0 : index
    %c0_12 = arith.constant 0 : index
    %17 = vector.load %arg6[%c0_11, %c0_12] : memref<16x128xf32, #tpu.memory_space<vmem>>, vector<16x128xf32>
    tpu.vector_store %arg6[%c0_11, %c0_12], %16 {strides = array<i32>} : memref<16x128xf32, #tpu.memory_space<vmem>>, vector<16x128xf32>,
    return
  }
  func.func @transform_0(%arg0: i32) -> (i32, i32) {
    %c0_i32 = arith.constant 0 : i32
    %c0_i32_0 = arith.constant 0 : i32
    return %c0_i32, %arg0 : i32, i32
  }
  func.func @transform_1(%arg0: i32) -> (i32, i32) {
    %c0_i32 = arith.constant 0 : i32
    %c0_i32_0 = arith.constant 0 : i32
    %c0_i32_1 = arith.constant 0 : i32
    return %c0_i32, %c0_i32_0 : i32, i32
  }
  func.func @transform_2(%arg0: i32) -> (i32, i32) {
    %c0_i32 = arith.constant 0 : i32
    %c0_i32_0 = arith.constant 0 : i32
    %c0_i32_1 = arith.constant 0 : i32
    return %c0_i32, %c0_i32_0 : i32, i32
  }
  func.func @transform_3(%arg0: i32) -> (i32, i32) {
    %c0_i32 = arith.constant 0 : i32
    %c0_i32_0 = arith.constant 0 : i32
    %c0_i32_1 = arith.constant 0 : i32
    return %c0_i32, %c0_i32_0 : i32, i32
  }
  func.func @transform_4(%arg0: i32) -> (i32, i32) {
    %c0_i32 = arith.constant 0 : i32
    %c0_i32_0 = arith.constant 0 : i32
    %c0_i32_1 = arith.constant 0 : i32
    return %c0_i32, %c0_i32_0 : i32, i32
  }
  func.func @transform_5(%arg0: i32) -> (i32, i32) {
    %c0_i32 = arith.constant 0 : i32
    %c0_i32_0 = arith.constant 0 : i32
    return %c0_i32, %arg0 : i32, i32
  }
}

</mosaic_0001>

<llo_original>
// kernel: tpu_custom_call.1
$region0: #{tpu_custom_call.1}
  #allocation0 [shape = 'u32[]', space=smem, size = 0x4, offset = 0x4, fixed_abs, tag = 'smem constant byte address 0x4 - core index']
  #allocation1 [shape = 'u32[144,128]{1,0:T(1,128)}', space=vmem, size = 0x12000, scoped, tag = 'internal scratch']
  %s0 = inlined_call_operand.vmem [shape: f32[1,128], index: 0, kind: input, shape index: {}]
  %s1 = inlined_call_operand.vmem [shape: f32[16,1], index: 1, kind: input, shape index: {}]
  %s2 = inlined_call_operand.vmem [shape: f32[16,1], index: 2, kind: input, shape index: {}]
  %s3 = inlined_call_operand.vmem [shape: f32[16,16], index: 3, kind: input, shape index: {}]
  %s4 = inlined_call_operand.vmem [shape: f32[16,1], index: 4, kind: input, shape index: {}]
  %s5 = inlined_call_operand.hbm [shape: f32[16,128], index: 5, kind: output, shape index: {}]
  %s6 = sld [smem:[#allocation0]]
  $region30: #{tpu_custom_call.1} parent=0
    _
  %s8 = ssub.s32 1, %s6
  %s9 = scalar_select 0, %s8, %s6
  $region1: #{tpu_custom_call.1} parent=0
    #allocation2 [shape = 'u8[8192]{0}', space=vmem, size = 0x2000, scoped, tag = 'output window, operand 0, single buffered']
    #allocation3 [shape = 's32[1]{0}', space=sflag, size = 0x4, scoped, tag = 'scoped memory for tpu_custom_call.1']
    %10 = vsyncpa [#allocation3], 0
    // Predicated region
    $region2: #{tpu_custom_call.1} parent=1 // pred_check
      _
    $region3: #{tpu_custom_call.1} parent=1 // pred_check_branch
      %12 = sbr.rel (0) target = $region5
    $region4: #{tpu_custom_call.1} parent=1 // pred_region
      _
    $region5: #{tpu_custom_call.1} parent=1 // pred_fallthru
      _
    // Predicated region
    $region6: #{tpu_custom_call.1} parent=1 // pred_check
      _
    $region7: #{tpu_custom_call.1} parent=1 // pred_check_branch
      %14 = sbr.rel (0) target = $region9
    $region8: #{tpu_custom_call.1} parent=1 // pred_region
      _
    $region9: #{tpu_custom_call.1} parent=1 // pred_fallthru
      _
    // Predicated region
    $region10: #{tpu_custom_call.1} parent=1 // pred_check
      _
    $region11: #{tpu_custom_call.1} parent=1 // pred_check_branch
      %16 = sbr.rel (0) target = $region13
    $region12: #{tpu_custom_call.1} parent=1 // pred_region
      _
    $region13: #{tpu_custom_call.1} parent=1 // pred_fallthru
      _
    // Predicated region
    $region14: #{tpu_custom_call.1} parent=1 // pred_check
      _
    $region15: #{tpu_custom_call.1} parent=1 // pred_check_branch
      %18 = sbr.rel (0) target = $region17
    $region16: #{tpu_custom_call.1} parent=1 // pred_region
      _
    $region17: #{tpu_custom_call.1} parent=1 // pred_fallthru
      _
    // Predicated region
    $region18: #{tpu_custom_call.1} parent=1 // pred_check
      _
    $region19: #{tpu_custom_call.1} parent=1 // pred_check_branch
      %20 = sbr.rel (0) target = $region21
    $region20: #{tpu_custom_call.1} parent=1 // pred_region
      _
    $region21: #{tpu_custom_call.1} parent=1 // pred_fallthru
      _
    %v21 = vld [vmem:[%s0] sm:$0x1]
    %v22 = vld [vmem:[%s1] sm:$0xff]
    %v23 = vld [vmem:[%s1 + $0x8] sm:$0xff]
    %25 = vset.pattern.permute.xlu0 0
    %26 = vperm.xlu0 %25, %v22
    %v27 = vpop.permute.xlu0 %26
    %30 = vset.pattern.permute.xlu0 0
    %31 = vperm.xlu0 %30, %v23
    %v32 = vpop.permute.xlu0 %31
    %v35 = vlaneseq
    %v36 = vshrl.u32 %v35, 7
    %v37 = vsub.s32 0, %v36
    %v38 = vrot.slane %v21, %v37
    %v40 = vmul.f32 %v27, %v38
    %v41 = vmul.f32 %v32, %v38
    %v42 = vld [vmem:[%s2] sm:$0xff]
    %v43 = vld [vmem:[%s2 + $0x8] sm:$0xff]
    %45 = vset.pattern.permute.xlu0 0
    %46 = vperm.xlu0 %45, %v42
    %v47 = vpop.permute.xlu0 %46
    %50 = vset.pattern.permute.xlu0 0
    %51 = vperm.xlu0 %50, %v43
    %v52 = vpop.permute.xlu0 %51
    %v54 = vadd.f32 %v40, %v47
    %v55 = vadd.f32 %v41, %v52
    %v56 = vmax.f32 %v54, 0.0
    %v57 = vmax.f32 %v55, 0.0
    %v58 = vld [vmem:[%s3] sm:$0xff]
    %v59 = vld [vmem:[%s3 + $0x8] sm:$0xff]
    %v60 = vld [vmem:[%s4] sm:$0xff]
    %v61 = vld [vmem:[%s4 + $0x8] sm:$0xff]
    %63 = vset.pattern.permute.xlu0 0
    %64 = vperm.xlu0 %63, %v60
    %v65 = vpop.permute.xlu0 %64
    %68 = vset.pattern.permute.xlu0 0
    %69 = vperm.xlu0 %68, %v61
    %v70 = vpop.permute.xlu0 %69
    %vm72 = vcmask 130048
    %v74 = vsel %vm72, %v58, 0
    %v77 = vsel %vm72, %v59, 0
    %79 = vmatprep.subr.mxu0 0.0
    %80 = vmatpush1.msra.mxu0 0.0
    %81 = vmatprep.subr.mxu0 0.0
    %82 = vmatpush1.msra.mxu0 0.0
    %83 = vmatprep.subr.mxu0 0.0
    %84 = vmatpush1.msra.mxu0 0.0
    %85 = vmatprep.subr.mxu0 0.0
    %86 = vmatpush1.msra.mxu0 0.0
    %87 = vmatprep.subr.mxu0 0.0
    %88 = vmatpush1.msra.mxu0 0.0
    %89 = vmatprep.subr.mxu0 0.0
    %90 = vmatpush1.msra.mxu0 0.0
    %91 = vmatprep.subr.mxu0 0.0
    %92 = vmatpush1.msra.mxu0 0.0
    %93 = vmatprep.subr.mxu0 0.0
    %94 = vmatpush1.msra.mxu0 0.0
    %95 = vmatprep.subr.mxu0 0.0
    %96 = vmatpush1.msra.mxu0 0.0
    %97 = vmatprep.subr.mxu0 0.0
    %98 = vmatpush1.msra.mxu0 0.0
    %99 = vmatprep.subr.mxu0 0.0
    %100 = vmatpush1.msra.mxu0 0.0
    %101 = vmatprep.subr.mxu0 0.0
    %102 = vmatpush1.msra.mxu0 0.0
    %103 = vmatprep.subr.mxu0 0.0
    %104 = vmatpush1.msra.mxu0 0.0
    %105 = vmatprep.subr.mxu0 0.0
    %106 = vmatpush1.msra.mxu0 0.0
    %107 = vmatprep.subr.mxu0 0.0
    %108 = vmatpush1.msra.mxu0 %v57
    %109 = vmatprep.subr.mxu0 0.0
    %110 = vmatpush1.msra.mxu0 %v56
    %111 = vmatprep.subr.mxu0 0.0
    %112 = vmatpush2.msra.mxu0 0.0
    %113 = vmatprep.subr.mxu0 0.0
    %114 = vmatpush2.msra.mxu0 0.0
    %115 = vmatprep.subr.mxu0 0.0
    %116 = vmatpush2.msra.mxu0 0.0
    %117 = vmatprep.subr.mxu0 0.0
    %118 = vmatpush2.msra.mxu0 0.0
    %119 = vmatprep.subr.mxu0 0.0
    %120 = vmatpush2.msra.mxu0 0.0
    %121 = vmatprep.subr.mxu0 0.0
    %122 = vmatpush2.msra.mxu0 0.0
    %123 = vmatprep.subr.mxu0 0.0
    %124 = vmatpush2.msra.mxu0 0.0
    %125 = vmatprep.subr.mxu0 0.0
    %126 = vmatpush2.msra.mxu0 0.0
    %127 = vmatprep.subr.mxu0 0.0
    %128 = vmatpush2.msra.mxu0 0.0
    %129 = vmatprep.subr.mxu0 0.0
    %130 = vmatpush2.msra.mxu0 0.0
    %131 = vmatprep.subr.mxu0 0.0
    %132 = vmatpush2.msra.mxu0 0.0
    %133 = vmatprep.subr.mxu0 0.0
    %134 = vmatpush2.msra.mxu0 0.0
    %135 = vmatprep.subr.mxu0 0.0
    %136 = vmatpush2.msra.mxu0 0.0
    %137 = vmatprep.subr.mxu0 0.0
    %138 = vmatpush2.msra.mxu0 0.0
    %139 = vmatprep.subr.mxu0 0.0
    %140 = vmatpush2.msra.mxu0 0.0
    %141 = vmatprep.subr.mxu0 0.0
    %142 = vmatpush2.msra.mxu0 0.0
    %143 = vmatprep.mubr.f32.mxu0 0.0
    %144 = vmatmul.mubr.f32.gmra.mxu0 %v74
    %v145 = vpop.f32.mrf.mxu0
    %v146 = vadd.f32 %v65, %v145
    %v147 = vpop.f32.mrf.mxu0
    %148 = vmatprep.mubr.f32.mxu0 0.0
    %149 = vmatmul.mubr.f32.gmra.mxu0 %v77
    %v150 = vpop.f32.mrf.mxu0
    %v151 = vadd.f32 %v70, %v150
    %v152 = vpop.f32.mrf.mxu0
    %153 = vdwg.mxu0
    %v154 = vmax.f32 %v146, 0.0
    %v155 = vmax.f32 %v151, 0.0
    %156 = vst [vmem:[#allocation2] sm:$0xff] %v154
    %157 = vst [vmem:[#allocation2 + $0x8] sm:$0xff] %v155
    // Predicated region
    $region22: #{tpu_custom_call.1} parent=1 // pred_check
      _
    $region23: #{tpu_custom_call.1} parent=1 // pred_check_branch
      %159 = sbr.rel (0) target = $region25
    $region24: #{tpu_custom_call.1} parent=1 // pred_region
      %s161 = ssub.s32 256, 256
      %162 = vsyncadd [#allocation3], %s161
      %s163 = sshll.u32 [#allocation2], 4
      %s164 = int_to_ptr.vmem [resolvable:$true] %s163
      %169 = dma.vmem_to_hbm [thread:$0]  %s164, 256, %s5, [#allocation3], 128, 128, 8
    $region25: #{tpu_custom_call.1} parent=1 // pred_fallthru
      _
    // Predicated region
    $region26: #{tpu_custom_call.1} parent=1 // pred_check
      _
    $region27: #{tpu_custom_call.1} parent=1 // pred_check_branch
      %171 = sbr.rel (0) target = $region29
    $region28: #{tpu_custom_call.1} parent=1 // pred_region
      %172 = dma.done [#allocation3], 256
    $region29: #{tpu_custom_call.1} parent=1 // pred_fallthru
      _
    %173 = vsyncpa [#allocation3], 1

</llo_original>
